<compile_context>
chip_gen: v6e
topology: v6e:2x2x1
jax: 0.10.0
libtpu: 0.0.40
codegen_flags: <defaults>
</compile_context>

<pallas_src>
import jax
import jax.numpy as jnp
from jax import lax
from jax.experimental import pallas as pl
from jax.experimental.pallas import tpu as pltpu


def _round_up(x: int, m: int) -> int:
    return (x + m - 1) // m * m


def _chip_config():
    """Per-generation tiling / VMEM budget, with v7x-safe defaults."""
    kind = ""
    try:
        kind = jax.devices()[0].device_kind.lower()
    except Exception:  # pragma: no cover - defensive only
        pass
    # Defaults are sized for the smallest-VMEM chip (v7x: 64 MiB physical,
    # 32 MiB scoped) and assume 2 TensorCores per chip (megacore=True).
    cfg = dict(vmem_limit=32 * 1024 * 1024, lane_align=256,
               tm_cap=512, tn_cap=512, tk_cap=1024, megacore=True)
    if "v5" in kind:
        # v5e: 128 MiB VMEM, 128x128 MXU tiles, 1 TC. Large tk cuts the
        # number of accumulator RMWs competing with its single vst slot.
        cfg = dict(vmem_limit=64 * 1024 * 1024, lane_align=128,
                   tm_cap=512, tn_cap=512, tk_cap=2048, megacore=False)
    elif "v6" in kind:
        # v6e: 128 MiB VMEM, 2x256x256 MXU, 1 TC.
        cfg = dict(vmem_limit=64 * 1024 * 1024, lane_align=256,
                   tm_cap=512, tn_cap=512, tk_cap=2048, megacore=False)
    return cfg


# ---------------------------------------------------------------------------
# Kernels
# ---------------------------------------------------------------------------

def _dot_xwT(x_tile, w_tile):
    # Contract x dim 1 with weight dim 1 (i.e. x @ W^T); the MXU consumes the
    # transposed operand natively, so the PyTorch (f_out, f_in) layout is kept.
    return lax.dot_general(
        x_tile, w_tile,
        dimension_numbers=(((1,), (1,)), ((), ())),
        preferred_element_type=jnp.float32,
    )


def _linear_kernel_single_k(x_ref, w_ref, b_ref, o_ref):
    """Single K step: no accumulator scratch, no pl.when guards."""
    o_ref[...] = (_dot_xwT(x_ref[...], w_ref[...]) + b_ref[...]).astype(o_ref.dtype)


def _linear_kernel_accum_out(x_ref, w_ref, b_ref, o_ref):
    """Multi-K, f32 output: accumulate directly into the resident o_ref tile."""
    k = pl.program_id(2)

    @pl.when(k == 0)
    def _():
        o_ref[...] = jnp.zeros_like(o_ref)

    o_ref[...] += _dot_xwT(x_ref[...], w_ref[...])

    @pl.when(k == pl.num_programs(2) - 1)
    def _():
        o_ref[...] = o_ref[...] + b_ref[...]


def _linear_kernel_scratch(x_ref, w_ref, b_ref, o_ref, acc_ref):
    """Multi-K, non-f32 output: f32 VMEM accumulator, cast on the last step."""
    k = pl.program_id(2)

    @pl.when(k == 0)
    def _():
        acc_ref[...] = jnp.zeros_like(acc_ref)

    acc_ref[...] += _dot_xwT(x_ref[...], w_ref[...])

    @pl.when(k == pl.num_programs(2) - 1)
    def _():
        o_ref[...] = (acc_ref[...] + b_ref[...]).astype(o_ref.dtype)


# ---------------------------------------------------------------------------
# Wrapper
# ---------------------------------------------------------------------------

def linear_net_forward(x, weight, bias, *, tm=None, tn=None, tk=None):
    """Pallas forward of LinearNet: y = x @ W^T + b.

    Args:
      x:      (B, features_in)
      weight: (features_out, features_in)  (PyTorch nn.Linear layout)
      bias:   (features_out,)
    Returns:
      (B, features_out), dtype of x.
    """
    B, f_in = x.shape
    f_out, f_in_w = weight.shape
    assert f_in == f_in_w, (f_in, f_in_w)

    cfg = _chip_config()
    lane_align = cfg["lane_align"]

    # dtype-aware sublane multiple for the M tile (packing along sublanes).
    sub = {4: 8, 2: 16, 1: 32}.get(jnp.dtype(x.dtype).itemsize, 8)

    if tm is None:
        tm = min(cfg["tm_cap"], _round_up(B, sub))
    if tn is None:
        tn = min(cfg["tn_cap"], _round_up(f_out, lane_align))
        # Megacore (v7x, 2 TCs): with a single M block, split N into >= 2
        # blocks (down to 128 lanes) so both cores get work.
        if cfg["megacore"] and _round_up(B, tm) // tm == 1:
            n128 = _round_up(f_out, 128)
            if n128 >= 256:
                tn = min(tn, max(128, _round_up(n128 // 2, 128)))
    if tk is None:
        tk = min(cfg["tk_cap"], _round_up(f_in, lane_align))

    Mp = _round_up(B, tm)
    Np = _round_up(f_out, tn)
    Kp = _round_up(f_in, tk)
    grid = (Mp // tm, Np // tn, Kp // tk)
    gm, gn, gk = grid

    # Tiny problems: pallas_call fixed overhead + MXU/lane padding dominate;
    # plain XLA is strictly faster (e.g. the module default f_in=f_out=1).
    if grid == (1, 1, 1) and 2 * Mp * Np * Kp < 4_000_000:
        return (x @ weight.T + bias).astype(x.dtype)

    # Zero-pad to tile multiples (zeros along K add nothing to the dot).
    if (Mp, Kp) != (B, f_in):
        x = jnp.pad(x, ((0, Mp - B), (0, Kp - f_in)))
    if (Np, Kp) != (f_out, f_in):
        weight = jnp.pad(weight, ((0, Np - f_out), (0, Kp - f_in)))
    b_row = bias.reshape(1, f_out)
    if Np != f_out:
        b_row = jnp.pad(b_row, ((0, 0), (0, Np - f_out)))

    itemsize = jnp.dtype(x.dtype).itemsize
    # Honest HBM traffic: x is re-streamed gn times, W re-streamed gm times.
    cost = pl.CostEstimate(
        flops=2 * Mp * Np * Kp,
        transcendentals=0,
        bytes_accessed=itemsize * (Mp * Kp * gn + Np * Kp * gm + Mp * Np + Np),
    )

    out_is_f32 = jnp.dtype(x.dtype) == jnp.float32
    if gk == 1:
        kernel = _linear_kernel_single_k
        scratch = []
    elif out_is_f32:
        kernel = _linear_kernel_accum_out
        scratch = []
    else:
        kernel = _linear_kernel_scratch
        scratch = [pltpu.VMEM((tm, tn), jnp.float32)]

    out = pl.pallas_call(
        kernel,
        out_shape=jax.ShapeDtypeStruct((Mp, Np), x.dtype),
        grid_spec=pltpu.PrefetchScalarGridSpec(
            num_scalar_prefetch=0,
            grid=grid,
            in_specs=[
                pl.BlockSpec((tm, tk), lambda i, j, k: (i, k)),   # x
                pl.BlockSpec((tn, tk), lambda i, j, k: (j, k)),   # W (f_out, f_in)
                pl.BlockSpec((1, tn), lambda i, j, k: (0, j)),    # bias row
            ],
            out_specs=pl.BlockSpec((tm, tn), lambda i, j, k: (i, j)),
            scratch_shapes=scratch,
        ),
        compiler_params=pltpu.CompilerParams(
            dimension_semantics=("parallel", "parallel", "arbitrary"),
            vmem_limit_bytes=cfg["vmem_limit"],
        ),
        cost_estimate=cost,
    )(x, weight, b_row)

    if (Mp, Np) != (B, f_out):
        out = out[:B, :f_out]
    return out


if __name__ == "__main__":
    key = jax.random.PRNGKey(0)
    kx, kw, kb, kx2 = jax.random.split(key, 4)

    # --- Pallas path 1: single-K-step specialized kernel, LinearNet init ----
    B, f_in, f_out = 128, 512, 256
    weight = jnp.ones((f_out, f_in), dtype=jnp.float32)   # W = 1 (module init)
    bias = jnp.zeros((f_out,), dtype=jnp.float32)          # b = 0 (module init)
    x = jax.random.normal(kx, (B, f_in), dtype=jnp.float32)

    y = jax.block_until_ready(linear_net_forward(x, weight, bias))
    y_ref = jnp.dot(x, weight.T, precision=jax.lax.Precision.HIGHEST) + bias
    assert y.shape == (B, f_out)
    assert jnp.allclose(y, y_ref, atol=1e-3, rtol=1e-3)

    # --- Pallas path 2: multi-K accumulation (tk forced < f_in), random W/b -
    w_r = jax.random.normal(kw, (f_out, f_in), dtype=jnp.float32)
    b_r = jax.random.normal(kb, (f_out,), dtype=jnp.float32)
    y2 = jax.block_until_ready(linear_net_forward(x, w_r, b_r, tk=256))
    y2_ref = jnp.dot(x, w_r.T, precision=jax.lax.Precision.HIGHEST) + b_r
    assert jnp.allclose(y2, y2_ref, atol=1e-3, rtol=1e-3)

    # --- Tiny default module shape (features_in = features_out = 1) --------
    # Auto-dispatches to the plain-jnp fallback (pallas overhead dominates).
    x_t = jax.random.normal(kx2, (4, 1), dtype=jnp.float32)
    w_t = jnp.ones((1, 1), dtype=jnp.float32)
    b_t = jnp.zeros((1,), dtype=jnp.float32)
    y_t = jax.block_until_ready(linear_net_forward(x_t, w_t, b_t))
    assert jnp.allclose(y_t, x_t, atol=1e-6)

    print("KERNEL_OK")
</pallas_src>

<mosaic_0001>
module attributes {stable_mosaic.version = 11 : i64} {
  func.func @_linear_kernel_single_k(%arg0: i32, %arg1: i32, %arg2: i32, %arg3: memref<128x512xf32, #tpu.memory_space<vmem>>, %arg4: memref<128x512xf32, #tpu.memory_space<vmem>>, %arg5: memref<1x128xf32, #tpu.memory_space<vmem>>, %arg6: memref<128x128xf32, #tpu.memory_space<vmem>>) attributes {dimension_semantics = [#tpu.dimension_semantics<parallel>, #tpu.dimension_semantics<parallel>, #tpu.dimension_semantics<arbitrary>], iteration_bounds = array<i64: 1, 2, 1>, scalar_prefetch = 0 : i64, scratch_operands = 0 : i64, tpu.core_type = #tpu.core_type<tc>, window_params = [{transform_indices = @transform_0, window_bounds = array<i64: 128, 512>}, {transform_indices = @transform_1, window_bounds = array<i64: 128, 512>}, {transform_indices = @transform_2, window_bounds = array<i64: 1, 128>}, {transform_indices = @transform_3, window_bounds = array<i64: 128, 128>}]} {
    %c0 = arith.constant 0 : index
    %c0_0 = arith.constant 0 : index
    %0 = vector.load %arg3[%c0, %c0_0] : memref<128x512xf32, #tpu.memory_space<vmem>>, vector<128x512xf32>
    %c0_1 = arith.constant 0 : index
    %c0_2 = arith.constant 0 : index
    %1 = vector.load %arg4[%c0_1, %c0_2] : memref<128x512xf32, #tpu.memory_space<vmem>>, vector<128x512xf32>
    %cst = arith.constant dense<0.000000e+00> : vector<128x128xf32>
    %2 = tpu.matmul %0, %1, %cst {dimension_numbers = #tpu.dot_dimension_numbers<[1], [1], [0], [0], [0, 0, 1, 0], [], []>} : vector<128x512xf32>, vector<128x512xf32>, vector<128x128xf32> -> vector<128x128xf32>
    %c0_3 = arith.constant 0 : index
    %c0_4 = arith.constant 0 : index
    %3 = vector.load %arg5[%c0_3, %c0_4] : memref<1x128xf32, #tpu.memory_space<vmem>>, vector<1x128xf32>
    %4 = vector.broadcast %3 : vector<1x128xf32> to vector<128x128xf32>
    %5 = arith.addf %2, %4 : vector<128x128xf32>
    %c0_5 = arith.constant 0 : index
    %c0_6 = arith.constant 0 : index
    %6 = vector.load %arg6[%c0_5, %c0_6] : memref<128x128xf32, #tpu.memory_space<vmem>>, vector<128x128xf32>
    tpu.vector_store %arg6[%c0_5, %c0_6], %5 {strides = array<i32>} : memref<128x128xf32, #tpu.memory_space<vmem>>, vector<128x128xf32>,
    return
  }
  func.func @transform_0(%arg0: i32, %arg1: i32, %arg2: i32) -> (i32, i32) {
    %c0_i32 = arith.constant 0 : i32
    return %arg0, %arg2 : i32, i32
  }
  func.func @transform_1(%arg0: i32, %arg1: i32, %arg2: i32) -> (i32, i32) {
    %c0_i32 = arith.constant 0 : i32
    return %arg1, %arg2 : i32, i32
  }
  func.func @transform_2(%arg0: i32, %arg1: i32, %arg2: i32) -> (i32, i32) {
    %c0_i32 = arith.constant 0 : i32
    %c0_i32_0 = arith.constant 0 : i32
    return %c0_i32, %arg1 : i32, i32
  }
  func.func @transform_3(%arg0: i32, %arg1: i32, %arg2: i32) -> (i32, i32) {
    %c0_i32 = arith.constant 0 : i32
    return %arg0, %arg1 : i32, i32
  }
}

</mosaic_0001>

<llo_original>
// kernel: tpu_custom_call.1
$region0: #{tpu_custom_call.1}
  #allocation0 [shape = 'u32[]', space=smem, size = 0x4, offset = 0x4, fixed_abs, tag = 'smem constant byte address 0x4 - core index']
  #allocation1 [shape = 'u32[144,128]{1,0:T(1,128)}', space=vmem, size = 0x12000, scoped, tag = 'internal scratch']
  %s0 = inlined_call_operand.hbm [shape: f32[128,512], index: 0, kind: input, shape index: {}]
  %s1 = inlined_call_operand.hbm [shape: f32[256,512], index: 1, kind: input, shape index: {}]
  %s2 = inlined_call_operand.vmem [shape: f32[1,256], index: 2, kind: input, shape index: {}]
  %s3 = inlined_call_operand.hbm [shape: f32[128,256], index: 3, kind: output, shape index: {}]
  %s4 = sld [smem:[#allocation0]]
  $region53: #{tpu_custom_call.1} parent=0
    _
  %s6 = ssub.s32 1, %s4
  %s7 = scalar_select 0, %s6, %s4
  $region1: #{tpu_custom_call.1} parent=0
    #allocation2 [shape = 'u8[262144]{0}', space=vmem, size = 0x40000, scoped, tag = 'input window, operand 0, single buffered']
    #allocation3 [shape = 's32[2]{0}', space=sflag, size = 0x8, scoped, tag = 'scoped memory for tpu_custom_call.1']
    #allocation4 [shape = 's32[2]{0}', space=sflag, size = 0x8, scoped, tag = 'scoped memory for tpu_custom_call.1']
    #allocation5 [shape = 'u8[524288]{0}', space=vmem, size = 0x80000, scoped, tag = 'input window, operand 1']
    #allocation6 [shape = 's32[2]{0}', space=sflag, size = 0x8, scoped, tag = 'scoped memory for tpu_custom_call.1']
    #allocation7 [shape = 'u8[131072]{0}', space=vmem, size = 0x20000, scoped, tag = 'output window, operand 0']
    %8 = vsyncpa [#allocation3], 0
    %9 = vsyncpa [#allocation6], 0
    %s10 = scalar_lea.sflag [#allocation6], 1
    %11 = vsyncpa %s10, 0
    %12 = vsyncpa [#allocation4], 0
    %s13 = scalar_lea.sflag [#allocation4], 1
    %14 = vsyncpa %s13, 0
    loop: start=0, step=1, limit=4
    $region2: #{tpu_custom_call.1} parent=1 // loop_pre_header
      _
    $region3: #{tpu_custom_call.1} parent=1 // loop_header
      %s16 = sphi 0, %s20
      %p17 = scmp.ge.s32.totalorder %s16, 4
      %s23 = sphi 0, %s42
      %s24 = sphi 0, %s38
      %s25 = sphi 0, %s34
      %s26 = sphi 0, %s23
      %s27 = sphi 0, %s24
      %s28 = sphi 0, %s25
      %s29 = sphi 0, %s26
      %s30 = sphi 0, %s27
      %s31 = sphi 0, %s28
      %s47 = sphi 0, %s49
      %s50 = sphi 0, %s47
      %s51 = sphi 0, %s50
      %s67 = sphi 0, %s51
      %s75 = sphi 0, %s77
      %s78 = sphi 0, %s75
      %s79 = sphi 0, %s78
      %s95 = sphi 0, %s79
      %s101 = sphi 0, %s103
      %s104 = sphi 0, %s101
      %s105 = sphi 0, %s104
      %s121 = sphi 0, %s105
      %s129 = sphi 0, %s131
      %s132 = sphi 0, %s129
      %s133 = sphi 0, %s132
      %s149 = sphi 0, %s133
    $region4: #{tpu_custom_call.1} parent=1 // loop_header_branch
      %19 = sbr.rel (%p17) target = $region8
    $region5: #{tpu_custom_call.1} parent=1 // loop_body
      %s21 = ssub.s32 %s16, 1
      %s22 = ssub.s32 %s16, 2
      %s32 = sadd.s32 1, %s25
      %p33 = scmp.ge.s32.totalorder %s32, 1
      %s34 = scalar_select %p33, 0, %s32
      %s35 = sadd.s32 1, %s24
      %s36 = scalar_select %p33, %s35, %s24
      %p37 = scmp.ge.s32.totalorder %s36, 2
      %s38 = scalar_select %p37, 0, %s36
      %s39 = sadd.s32 1, %s23
      %s40 = scalar_select %p37, %s39, %s23
      %p41 = scmp.ge.s32.totalorder %s40, 1
      %s42 = scalar_select %p41, 0, %s40
      %s43 = ssub.s32 %s23, %s42
      %s44 = ssub.s32 %s25, %s34
      %s45 = sor.u32 %s43, %s44
      %p46 = scmp.eq.s32.totalorder %s45, 0
      %s48 = sadd.s32 %s47, 1
      %s49 = scalar_select %p46, %s47, %s48
      %p52 = pneg %p46
      %p53 = scmp.eq.s32.totalorder %s16, 1
      %p54 = por %p52, %p53
      %p55 = scmp.ne.s32.totalorder %s47, %s50
      %p56 = scmp.eq.s32.totalorder %s16, 0
      %p57 = por %p55, %p56
      %p58 = scmp.ne.s32.totalorder %s47, %s50
      %p59 = scmp.eq.s32.totalorder %s21, 1
      %p60 = por %p58, %p59
      %p61 = scmp.ne.s32.totalorder %s50, %s51
      %p62 = scmp.eq.s32.totalorder %s21, 0
      %p63 = por %p61, %p62
      %p64 = scmp.ne.s32.totalorder %s50, %s51
      %p65 = scmp.eq.s32.totalorder %s22, 1
      %p66 = por %p64, %p65
      %p68 = scmp.ne.s32.totalorder %s51, %s67
      %p69 = scmp.eq.s32.totalorder %s22, 0
      %p70 = por %p68, %p69
      %s71 = ssub.s32 %s24, %s38
      %s72 = ssub.s32 %s25, %s34
      %s73 = sor.u32 %s71, %s72
      %p74 = scmp.eq.s32.totalorder %s73, 0
      %s76 = sadd.s32 %s75, 1
      %s77 = scalar_select %p74, %s75, %s76
      %p80 = pneg %p74
      %p81 = scmp.eq.s32.totalorder %s16, 1
      %p82 = por %p80, %p81
      %p83 = scmp.ne.s32.totalorder %s75, %s78
      %p84 = scmp.eq.s32.totalorder %s16, 0
      %p85 = por %p83, %p84
      %p86 = scmp.ne.s32.totalorder %s75, %s78
      %p87 = scmp.eq.s32.totalorder %s21, 1
      %p88 = por %p86, %p87
      %p89 = scmp.ne.s32.totalorder %s78, %s79
      %p90 = scmp.eq.s32.totalorder %s21, 0
      %p91 = por %p89, %p90
      %p92 = scmp.ne.s32.totalorder %s78, %s79
      %p93 = scmp.eq.s32.totalorder %s22, 1
      %p94 = por %p92, %p93
      %p96 = scmp.ne.s32.totalorder %s79, %s95
      %p97 = scmp.eq.s32.totalorder %s22, 0
      %p98 = por %p96, %p97
      %s99 = ssub.s32 %s24, %s38
      %p100 = scmp.eq.s32.totalorder %s99, 0
      %s102 = sadd.s32 %s101, 1
      %s103 = scalar_select %p100, %s101, %s102
      %p106 = pneg %p100
      %p107 = scmp.eq.s32.totalorder %s16, 1
      %p108 = por %p106, %p107
      %p109 = scmp.ne.s32.totalorder %s101, %s104
      %p110 = scmp.eq.s32.totalorder %s16, 0
      %p111 = por %p109, %p110
      %p112 = scmp.ne.s32.totalorder %s101, %s104
      %p113 = scmp.eq.s32.totalorder %s21, 1
      %p114 = por %p112, %p113
      %p115 = scmp.ne.s32.totalorder %s104, %s105
      %p116 = scmp.eq.s32.totalorder %s21, 0
      %p117 = por %p115, %p116
      %p118 = scmp.ne.s32.totalorder %s104, %s105
      %p119 = scmp.eq.s32.totalorder %s22, 1
      %p120 = por %p118, %p119
      %p122 = scmp.ne.s32.totalorder %s105, %s121
      %p123 = scmp.eq.s32.totalorder %s22, 0
      %p124 = por %p122, %p123
      %s125 = ssub.s32 %s23, %s42
      %s126 = ssub.s32 %s24, %s38
      %s127 = sor.u32 %s125, %s126
      %p128 = scmp.eq.s32.totalorder %s127, 0
      %s130 = sadd.s32 %s129, 1
      %s131 = scalar_select %p128, %s129, %s130
      %p134 = pneg %p128
      %p135 = scmp.eq.s32.totalorder %s16, 1
      %p136 = por %p134, %p135
      %p137 = scmp.ne.s32.totalorder %s129, %s132
      %p138 = scmp.eq.s32.totalorder %s16, 0
      %p139 = por %p137, %p138
      %p140 = scmp.ne.s32.totalorder %s129, %s132
      %p141 = scmp.eq.s32.totalorder %s21, 1
      %p142 = por %p140, %p141
      %p143 = scmp.ne.s32.totalorder %s132, %s133
      %p144 = scmp.eq.s32.totalorder %s21, 0
      %p145 = por %p143, %p144
      %p146 = scmp.ne.s32.totalorder %s132, %s133
      %p147 = scmp.eq.s32.totalorder %s22, 1
      %p148 = por %p146, %p147
      %p150 = scmp.ne.s32.totalorder %s133, %s149
      %p151 = scmp.eq.s32.totalorder %s22, 0
      %p152 = por %p150, %p151
      %p153 = scmp.le.s32.totalorder 1, %s16
      %p154 = scmp.lt.s32.totalorder %s16, 3
      %p155 = pnand %p153, %p154
      %p156 = pneg %p155
      // Predicated region
      $region9: #{tpu_custom_call.1} parent=5 // pred_check
        _
      $region10: #{tpu_custom_call.1} parent=5 // pred_check_branch
        %158 = sbr.rel (%p155) target = $region12
      $region11: #{tpu_custom_call.1} parent=5 // pred_region
        %s159 = ssub.s32 %s16, 1
        // Predicated region
        $region13: #{tpu_custom_call.1} parent=11 // pred_check
          %p160 = pneg %p63
        $region14: #{tpu_custom_call.1} parent=11 // pred_check_branch
          %162 = sbr.rel (%p160) target = $region16
        $region15: #{tpu_custom_call.1} parent=11 // pred_region
          %s163 = smul.u32 16, %s26
          %s164 = smul.u32 4, %s28
          %s166 = ssub.s32 8192, 8192
          %167 = vsyncadd [#allocation3], %s166
          %s168 = smul.addr %s163, 4
          %s169 = sadd.s32 %s164, %s168
          %s170 = smul.addr %s169, 128
          %s171 = scalar_lea.hbm %s0, %s170
          %s172 = sshll.u32 [#allocation2], 4
          %s173 = int_to_ptr.vmem [resolvable:$true] %s172
          %178 = dma.hbm_to_vmem [thread:$0]  %s171, 8192, %s173, [#allocation3], 512, 512, 32
        $region16: #{tpu_custom_call.1} parent=11 // pred_fallthru
          _
      $region12: #{tpu_custom_call.1} parent=5 // pred_fallthru
        _
      %p179 = scmp.lt.s32.totalorder %s16, 2
      // Predicated region
      $region17: #{tpu_custom_call.1} parent=5 // pred_check
        %p180 = pneg %p179
      $region18: #{tpu_custom_call.1} parent=5 // pred_check_branch
        %182 = sbr.rel (%p180) target = $region20
      $region19: #{tpu_custom_call.1} parent=5 // pred_region
        // Predicated region
        $region21: #{tpu_custom_call.1} parent=19 // pred_check
          %p183 = pneg %p85
        $region22: #{tpu_custom_call.1} parent=19 // pred_check_branch
          %185 = sbr.rel (%p183) target = $region24
        $region23: #{tpu_custom_call.1} parent=19 // pred_region
          %s186 = sand.u32 %s75, 1
          %s187 = scalar_lea.sflag [#allocation6], %s186
          %s188 = sand.u32 %s75, 1
          %s189 = smul.addr %s188, 512
          %s190 = scalar_lea.vmem [#allocation5], %s189
          %s191 = smul.u32 16, %s24
          %s192 = smul.u32 4, %s25
          %s194 = ssub.s32 8192, 8192
          %195 = vsyncadd %s187, %s194
          %s196 = smul.addr %s191, 4
          %s197 = sadd.s32 %s192, %s196
          %s198 = smul.addr %s197, 128
          %s199 = scalar_lea.hbm %s1, %s198
          %s200 = sshll.u32 %s190, 4
          %s201 = int_to_ptr.vmem [resolvable:$true] %s200
          %206 = dma.hbm_to_vmem [thread:$0]  %s199, 8192, %s201, %s187, 512, 512, 32
        $region24: #{tpu_custom_call.1} parent=19 // pred_fallthru
          _
        // Predicated region
        $region25: #{tpu_custom_call.1} parent=19 // pred_check
          %p207 = pneg %p111
        $region26: #{tpu_custom_call.1} parent=19 // pred_check_branch
          %209 = sbr.rel (%p207) target = $region28
        $region27: #{tpu_custom_call.1} parent=19 // pred_region
          %p210 = scmp.lt.s32.totalorder %s24, 1
          %s211 = scalar_select %p210, %s24, 1
          %s212 = scalar_lea.vmem %s2, %s211
        $region28: #{tpu_custom_call.1} parent=19 // pred_fallthru
          _
      $region20: #{tpu_custom_call.1} parent=5 // pred_fallthru
        _
      %p213 = scmp.le.s32.totalorder 1, %s16
      %p214 = scmp.lt.s32.totalorder %s16, 3
      %p215 = pnand %p213, %p214
      %p216 = pneg %p215
      // Predicated region
      $region29: #{tpu_custom_call.1} parent=5 // pred_check
        _
      $region30: #{tpu_custom_call.1} parent=5 // pred_check_branch
        %218 = sbr.rel (%p215) target = $region32
      $region31: #{tpu_custom_call.1} parent=5 // pred_region
        %s219 = ssub.s32 %s16, 1
        // Predicated region
        $region33: #{tpu_custom_call.1} parent=31 // pred_check
          %p220 = pneg %p63
        $region34: #{tpu_custom_call.1} parent=31 // pred_check_branch
          %222 = sbr.rel (%p220) target = $region36
        $region35: #{tpu_custom_call.1} parent=31 // pred_region
          %223 = dma.done [#allocation3], 8192
        $region36: #{tpu_custom_call.1} parent=31 // pred_fallthru
          _
        %s224 = sand.u32 %s78, 1
        %s225 = scalar_lea.sflag [#allocation6], %s224
        %s226 = sand.u32 %s78, 1
        %s227 = smul.addr %s226, 512
        %s228 = scalar_lea.vmem [#allocation5], %s227
        // Predicated region
        $region37: #{tpu_custom_call.1} parent=31 // pred_check
          %p229 = pneg %p91
        $region38: #{tpu_custom_call.1} parent=31 // pred_check_branch
          %231 = sbr.rel (%p229) target = $region40
        $region39: #{tpu_custom_call.1} parent=31 // pred_region
          %232 = dma.done %s225, 8192
        $region40: #{tpu_custom_call.1} parent=31 // pred_fallthru
          _
        %p233 = pneg %p63
        %p234 = pneg %p60
        %s235 = sand.u32 %s78, 1
        %s236 = scalar_lea.sflag [#allocation6], %s235
        %s237 = sand.u32 %s78, 1
        %s238 = smul.addr %s237, 512
        %s239 = scalar_lea.vmem [#allocation5], %s238
        %p240 = pneg %p91
        %p241 = pneg %p88
        %p242 = scmp.lt.s32.totalorder %s27, 1
        %s243 = scalar_select %p242, %s27, 1
        %s244 = scalar_lea.vmem %s2, %s243
        %p245 = pneg %p117
        %p246 = pneg %p114
        %p247 = pneg %p145
        %p248 = pneg %p142
        %s249 = sand.u32 %s132, 1
        %s250 = scalar_lea.sflag [#allocation4], %s249
        %s251 = sand.u32 %s132, 1
        %s252 = smul.addr %s251, 128
        %s253 = scalar_lea.vmem [#allocation7], %s252
        %s254 = smul.u32 16, %s26
        %s255 = smul.u32 4, %s28
        %s256 = smul.u32 16, %s27
        %s257 = smul.u32 4, %s28
        %p258 = scmp.lt.s32.totalorder %s27, 1
        %s259 = scalar_select %p258, %s27, 1
        %s260 = scalar_lea.vmem %s2, %s259
        %s261 = smul.u32 16, %s26
        %v262 = vld [vmem:[#allocation2] sm:$0xff]
        %v263 = vld [vmem:[#allocation2 + $0x8] sm:$0xff]
        %v264 = vld [vmem:[#allocation2 + $0x10] sm:$0xff]
        %v265 = vld [vmem:[#allocation2 + $0x18] sm:$0xff]
        %v266 = vld [vmem:[#allocation2 + $0x20] sm:$0xff]
        %v267 = vld [vmem:[#allocation2 + $0x28] sm:$0xff]
        %v268 = vld [vmem:[#allocation2 + $0x30] sm:$0xff]
        %v269 = vld [vmem:[#allocation2 + $0x38] sm:$0xff]
        %v270 = vld [vmem:[#allocation2 + $0x40] sm:$0xff]
        %v271 = vld [vmem:[#allocation2 + $0x48] sm:$0xff]
        %v272 = vld [vmem:[#allocation2 + $0x50] sm:$0xff]
        %v273 = vld [vmem:[#allocation2 + $0x58] sm:$0xff]
        %v274 = vld [vmem:[#allocation2 + $0x60] sm:$0xff]
        %v275 = vld [vmem:[#allocation2 + $0x68] sm:$0xff]
        %v276 = vld [vmem:[#allocation2 + $0x70] sm:$0xff]
        %v277 = vld [vmem:[#allocation2 + $0x78] sm:$0xff]
        %v278 = vld [vmem:[#allocation2 + $0x80] sm:$0xff]
        %v279 = vld [vmem:[#allocation2 + $0x88] sm:$0xff]
        %v280 = vld [vmem:[#allocation2 + $0x90] sm:$0xff]
        %v281 = vld [vmem:[#allocation2 + $0x98] sm:$0xff]
        %v282 = vld [vmem:[#allocation2 + $0xa0] sm:$0xff]
        %v283 = vld [vmem:[#allocation2 + $0xa8] sm:$0xff]
        %v284 = vld [vmem:[#allocation2 + $0xb0] sm:$0xff]
        %v285 = vld [vmem:[#allocation2 + $0xb8] sm:$0xff]
        %v286 = vld [vmem:[#allocation2 + $0xc0] sm:$0xff]
        %v287 = vld [vmem:[#allocation2 + $0xc8] sm:$0xff]
        %v288 = vld [vmem:[#allocation2 + $0xd0] sm:$0xff]
        %v289 = vld [vmem:[#allocation2 + $0xd8] sm:$0xff]
        %v290 = vld [vmem:[#allocation2 + $0xe0] sm:$0xff]
        %v291 = vld [vmem:[#allocation2 + $0xe8] sm:$0xff]
        %v292 = vld [vmem:[#allocation2 + $0xf0] sm:$0xff]
        %v293 = vld [vmem:[#allocation2 + $0xf8] sm:$0xff]
        %v294 = vld [vmem:[#allocation2 + $0x100] sm:$0xff]
        %v295 = vld [vmem:[#allocation2 + $0x108] sm:$0xff]
        %v296 = vld [vmem:[#allocation2 + $0x110] sm:$0xff]
        %v297 = vld [vmem:[#allocation2 + $0x118] sm:$0xff]
        %v298 = vld [vmem:[#allocation2 + $0x120] sm:$0xff]
        %v299 = vld [vmem:[#allocation2 + $0x128] sm:$0xff]
        %v300 = vld [vmem:[#allocation2 + $0x130] sm:$0xff]
        %v301 = vld [vmem:[#allocation2 + $0x138] sm:$0xff]
        %v302 = vld [vmem:[#allocation2 + $0x140] sm:$0xff]
        %v303 = vld [vmem:[#allocation2 + $0x148] sm:$0xff]
        %v304 = vld [vmem:[#allocation2 + $0x150] sm:$0xff]
        %v305 = vld [vmem:[#allocation2 + $0x158] sm:$0xff]
        %v306 = vld [vmem:[#allocation2 + $0x160] sm:$0xff]
        %v307 = vld [vmem:[#allocation2 + $0x168] sm:$0xff]
        %v308 = vld [vmem:[#allocation2 + $0x170] sm:$0xff]
        %v309 = vld [vmem:[#allocation2 + $0x178] sm:$0xff]
        %v310 = vld [vmem:[#allocation2 + $0x180] sm:$0xff]
        %v311 = vld [vmem:[#allocation2 + $0x188] sm:$0xff]
        %v312 = vld [vmem:[#allocation2 + $0x190] sm:$0xff]
        %v313 = vld [vmem:[#allocation2 + $0x198] sm:$0xff]
        %v314 = vld [vmem:[#allocation2 + $0x1a0] sm:$0xff]
        %v315 = vld [vmem:[#allocation2 + $0x1a8] sm:$0xff]
        %v316 = vld [vmem:[#allocation2 + $0x1b0] sm:$0xff]
        %v317 = vld [vmem:[#allocation2 + $0x1b8] sm:$0xff]
        %v318 = vld [vmem:[#allocation2 + $0x1c0] sm:$0xff]
        %v319 = vld [vmem:[#allocation2 + $0x1c8] sm:$0xff]
        %v320 = vld [vmem:[#allocation2 + $0x1d0] sm:$0xff]
        %v321 = vld [vmem:[#allocation2 + $0x1d8] sm:$0xff]
        %v322 = vld [vmem:[#allocation2 + $0x1e0] sm:$0xff]
        %v323 = vld [vmem:[#allocation2 + $0x1e8] sm:$0xff]
        %v324 = vld [vmem:[#allocation2 + $0x1f0] sm:$0xff]
        %v325 = vld [vmem:[#allocation2 + $0x1f8] sm:$0xff]
        %v326 = vld [vmem:[%s228] sm:$0xff]
        %v327 = vld [vmem:[%s228 + $0x8] sm:$0xff]
        %v328 = vld [vmem:[%s228 + $0x10] sm:$0xff]
        %v329 = vld [vmem:[%s228 + $0x18] sm:$0xff]
        %v330 = vld [vmem:[%s228 + $0x20] sm:$0xff]
        %v331 = vld [vmem:[%s228 + $0x28] sm:$0xff]
        %v332 = vld [vmem:[%s228 + $0x30] sm:$0xff]
        %v333 = vld [vmem:[%s228 + $0x38] sm:$0xff]
        %v334 = vld [vmem:[%s228 + $0x40] sm:$0xff]
        %v335 = vld [vmem:[%s228 + $0x48] sm:$0xff]
        %v336 = vld [vmem:[%s228 + $0x50] sm:$0xff]
        %v337 = vld [vmem:[%s228 + $0x58] sm:$0xff]
        %v338 = vld [vmem:[%s228 + $0x60] sm:$0xff]
        %v339 = vld [vmem:[%s228 + $0x68] sm:$0xff]
        %v340 = vld [vmem:[%s228 + $0x70] sm:$0xff]
        %v341 = vld [vmem:[%s228 + $0x78] sm:$0xff]
        %v342 = vld [vmem:[%s228 + $0x80] sm:$0xff]
        %v343 = vld [vmem:[%s228 + $0x88] sm:$0xff]
        %v344 = vld [vmem:[%s228 + $0x90] sm:$0xff]
        %v345 = vld [vmem:[%s228 + $0x98] sm:$0xff]
        %v346 = vld [vmem:[%s228 + $0xa0] sm:$0xff]
        %v347 = vld [vmem:[%s228 + $0xa8] sm:$0xff]
        %v348 = vld [vmem:[%s228 + $0xb0] sm:$0xff]
        %v349 = vld [vmem:[%s228 + $0xb8] sm:$0xff]
        %v350 = vld [vmem:[%s228 + $0xc0] sm:$0xff]
        %v351 = vld [vmem:[%s228 + $0xc8] sm:$0xff]
        %v352 = vld [vmem:[%s228 + $0xd0] sm:$0xff]
        %v353 = vld [vmem:[%s228 + $0xd8] sm:$0xff]
        %v354 = vld [vmem:[%s228 + $0xe0] sm:$0xff]
        %v355 = vld [vmem:[%s228 + $0xe8] sm:$0xff]
        %v356 = vld [vmem:[%s228 + $0xf0] sm:$0xff]
        %v357 = vld [vmem:[%s228 + $0xf8] sm:$0xff]
        %v358 = vld [vmem:[%s228 + $0x100] sm:$0xff]
        %v359 = vld [vmem:[%s228 + $0x108] sm:$0xff]
        %v360 = vld [vmem:[%s228 + $0x110] sm:$0xff]
        %v361 = vld [vmem:[%s228 + $0x118] sm:$0xff]
        %v362 = vld [vmem:[%s228 + $0x120] sm:$0xff]
        %v363 = vld [vmem:[%s228 + $0x128] sm:$0xff]
        %v364 = vld [vmem:[%s228 + $0x130] sm:$0xff]
        %v365 = vld [vmem:[%s228 + $0x138] sm:$0xff]
        %v366 = vld [vmem:[%s228 + $0x140] sm:$0xff]
        %v367 = vld [vmem:[%s228 + $0x148] sm:$0xff]
        %v368 = vld [vmem:[%s228 + $0x150] sm:$0xff]
        %v369 = vld [vmem:[%s228 + $0x158] sm:$0xff]
        %v370 = vld [vmem:[%s228 + $0x160] sm:$0xff]
        %v371 = vld [vmem:[%s228 + $0x168] sm:$0xff]
        %v372 = vld [vmem:[%s228 + $0x170] sm:$0xff]
        %v373 = vld [vmem:[%s228 + $0x178] sm:$0xff]
        %v374 = vld [vmem:[%s228 + $0x180] sm:$0xff]
        %v375 = vld [vmem:[%s228 + $0x188] sm:$0xff]
        %v376 = vld [vmem:[%s228 + $0x190] sm:$0xff]
        %v377 = vld [vmem:[%s228 + $0x198] sm:$0xff]
        %v378 = vld [vmem:[%s228 + $0x1a0] sm:$0xff]
        %v379 = vld [vmem:[%s228 + $0x1a8] sm:$0xff]
        %v380 = vld [vmem:[%s228 + $0x1b0] sm:$0xff]
        %v381 = vld [vmem:[%s228 + $0x1b8] sm:$0xff]
        %v382 = vld [vmem:[%s228 + $0x1c0] sm:$0xff]
        %v383 = vld [vmem:[%s228 + $0x1c8] sm:$0xff]
        %v384 = vld [vmem:[%s228 + $0x1d0] sm:$0xff]
        %v385 = vld [vmem:[%s228 + $0x1d8] sm:$0xff]
        %v386 = vld [vmem:[%s228 + $0x1e0] sm:$0xff]
        %v387 = vld [vmem:[%s228 + $0x1e8] sm:$0xff]
        %v388 = vld [vmem:[%s228 + $0x1f0] sm:$0xff]
        %v389 = vld [vmem:[%s228 + $0x1f8] sm:$0xff]
        %v390 = vld [vmem:[%s260] sm:$0x1]
        %v392 = vlaneseq
        %v393 = vshrl.u32 %v392, 7
        %v394 = vsub.s32 0, %v393
        %v395 = vrot.slane %v390, %v394
        %397 = vmatprep.subr.mxu0 %v387
        %398 = vmatpush1.xpose.msra.mxu0 %v386
        %399 = vmatprep.subr.mxu0 %v383
        %400 = vmatpush1.xpose.msra.mxu0 %v382
        %401 = vmatprep.subr.mxu0 %v379
        %402 = vmatpush1.xpose.msra.mxu0 %v378
        %403 = vmatprep.subr.mxu0 %v375
        %404 = vmatpush1.xpose.msra.mxu0 %v374
        %405 = vmatprep.subr.mxu0 %v371
        %406 = vmatpush1.xpose.msra.mxu0 %v370
        %407 = vmatprep.subr.mxu0 %v367
        %408 = vmatpush1.xpose.msra.mxu0 %v366
        %409 = vmatprep.subr.mxu0 %v363
        %410 = vmatpush1.xpose.msra.mxu0 %v362
        %411 = vmatprep.subr.mxu0 %v359
        %412 = vmatpush1.xpose.msra.mxu0 %v358
        %413 = vmatprep.subr.mxu0 %v355
        %414 = vmatpush1.xpose.msra.mxu0 %v354
        %415 = vmatprep.subr.mxu0 %v351
        %416 = vmatpush1.xpose.msra.mxu0 %v350
        %417 = vmatprep.subr.mxu0 %v347
        %418 = vmatpush1.xpose.msra.mxu0 %v346
        %419 = vmatprep.subr.mxu0 %v343
        %420 = vmatpush1.xpose.msra.mxu0 %v342
        %421 = vmatprep.subr.mxu0 %v339
        %422 = vmatpush1.xpose.msra.mxu0 %v338
        %423 = vmatprep.subr.mxu0 %v335
        %424 = vmatpush1.xpose.msra.mxu0 %v334
        %425 = vmatprep.subr.mxu0 %v331
        %426 = vmatpush1.xpose.msra.mxu0 %v330
        %427 = vmatprep.subr.mxu0 %v327
        %428 = vmatpush1.xpose.msra.mxu0 %v326
        %429 = vmatprep.subr.mxu0 0.0
        %430 = vmatpush2.xpose.msra.mxu0 0.0
        %431 = vmatprep.subr.mxu0 0.0
        %432 = vmatpush2.xpose.msra.mxu0 0.0
        %433 = vmatprep.subr.mxu0 0.0
        %434 = vmatpush2.xpose.msra.mxu0 0.0
        %435 = vmatprep.subr.mxu0 0.0
        %436 = vmatpush2.xpose.msra.mxu0 0.0
        %437 = vmatprep.subr.mxu0 0.0
        %438 = vmatpush2.xpose.msra.mxu0 0.0
        %439 = vmatprep.subr.mxu0 0.0
        %440 = vmatpush2.xpose.msra.mxu0 0.0
        %441 = vmatprep.subr.mxu0 0.0
        %442 = vmatpush2.xpose.msra.mxu0 0.0
        %443 = vmatprep.subr.mxu0 0.0
        %444 = vmatpush2.xpose.msra.mxu0 0.0
        %445 = vmatprep.subr.mxu0 0.0
        %446 = vmatpush2.xpose.msra.mxu0 0.0
        %447 = vmatprep.subr.mxu0 0.0
        %448 = vmatpush2.xpose.msra.mxu0 0.0
        %449 = vmatprep.subr.mxu0 0.0
        %450 = vmatpush2.xpose.msra.mxu0 0.0
        %451 = vmatprep.subr.mxu0 0.0
        %452 = vmatpush2.xpose.msra.mxu0 0.0
        %453 = vmatprep.subr.mxu0 0.0
        %454 = vmatpush2.xpose.msra.mxu0 0.0
        %455 = vmatprep.subr.mxu0 0.0
        %456 = vmatpush2.xpose.msra.mxu0 0.0
        %457 = vmatprep.subr.mxu0 0.0
        %458 = vmatpush2.xpose.msra.mxu0 0.0
        %459 = vmatprep.subr.mxu0 0.0
        %460 = vmatpush2.xpose.msra.mxu0 0.0
        %461 = vmatprep.mubr.f32.mxu0 %v263
        %462 = vmatmul.mubr.f32.gmra.mxu0 %v262
        %v463 = vpop.f32.mrf.mxu0
        %v464 = vadd.f32 %v395, %v463
        %v465 = vpop.f32.mrf.mxu0
        %466 = vmatprep.mubr.f32.mxu0 %v267
        %467 = vmatmul.mubr.f32.gmra.mxu0 %v266
        %v468 = vpop.f32.mrf.mxu0
        %v469 = vadd.f32 %v395, %v468
        %v470 = vpop.f32.mrf.mxu0
        %471 = vmatprep.mubr.f32.mxu0 %v271
        %472 = vmatmul.mubr.f32.gmra.mxu0 %v270
        %v473 = vpop.f32.mrf.mxu0
        %v474 = vadd.f32 %v395, %v473
        %v475 = vpop.f32.mrf.mxu0
        %476 = vmatprep.mubr.f32.mxu0 %v275
        %477 = vmatmul.mubr.f32.gmra.mxu0 %v274
        %v478 = vpop.f32.mrf.mxu0
        %v479 = vadd.f32 %v395, %v478
        %v480 = vpop.f32.mrf.mxu0
        %481 = vmatprep.mubr.f32.mxu0 %v279
        %482 = vmatmul.mubr.f32.gmra.mxu0 %v278
        %v483 = vpop.f32.mrf.mxu0
        %v484 = vadd.f32 %v395, %v483
        %v485 = vpop.f32.mrf.mxu0
        %486 = vmatprep.mubr.f32.mxu0 %v283
        %487 = vmatmul.mubr.f32.gmra.mxu0 %v282
        %v488 = vpop.f32.mrf.mxu0
        %v489 = vadd.f32 %v395, %v488
        %v490 = vpop.f32.mrf.mxu0
        %491 = vmatprep.mubr.f32.mxu0 %v287
        %492 = vmatmul.mubr.f32.gmra.mxu0 %v286
        %v493 = vpop.f32.mrf.mxu0
        %v494 = vadd.f32 %v395, %v493
        %v495 = vpop.f32.mrf.mxu0
        %496 = vmatprep.mubr.f32.mxu0 %v291
        %497 = vmatmul.mubr.f32.gmra.mxu0 %v290
        %v498 = vpop.f32.mrf.mxu0
        %v499 = vadd.f32 %v395, %v498
        %v500 = vpop.f32.mrf.mxu0
        %501 = vmatprep.mubr.f32.mxu0 %v295
        %502 = vmatmul.mubr.f32.gmra.mxu0 %v294
        %v503 = vpop.f32.mrf.mxu0
        %v504 = vadd.f32 %v395, %v503
        %v505 = vpop.f32.mrf.mxu0
        %506 = vmatprep.mubr.f32.mxu0 %v299
        %507 = vmatmul.mubr.f32.gmra.mxu0 %v298
        %v508 = vpop.f32.mrf.mxu0
        %v509 = vadd.f32 %v395, %v508
        %v510 = vpop.f32.mrf.mxu0
        %511 = vmatprep.mubr.f32.mxu0 %v303
        %512 = vmatmul.mubr.f32.gmra.mxu0 %v302
        %v513 = vpop.f32.mrf.mxu0
        %v514 = vadd.f32 %v395, %v513
        %v515 = vpop.f32.mrf.mxu0
        %516 = vmatprep.mubr.f32.mxu0 %v307
        %517 = vmatmul.mubr.f32.gmra.mxu0 %v306
        %v518 = vpop.f32.mrf.mxu0
        %v519 = vadd.f32 %v395, %v518
        %v520 = vpop.f32.mrf.mxu0
        %521 = vmatprep.mubr.f32.mxu0 %v311
        %522 = vmatmul.mubr.f32.gmra.mxu0 %v310
        %v523 = vpop.f32.mrf.mxu0
        %v524 = vadd.f32 %v395, %v523
        %v525 = vpop.f32.mrf.mxu0
        %526 = vmatprep.mubr.f32.mxu0 %v315
        %527 = vmatmul.mubr.f32.gmra.mxu0 %v314
        %v528 = vpop.f32.mrf.mxu0
        %v529 = vadd.f32 %v395, %v528
        %v530 = vpop.f32.mrf.mxu0
        %531 = vmatprep.mubr.f32.mxu0 %v319
        %532 = vmatmul.mubr.f32.gmra.mxu0 %v318
        %v533 = vpop.f32.mrf.mxu0
        %v534 = vadd.f32 %v395, %v533
        %v535 = vpop.f32.mrf.mxu0
        %536 = vmatprep.mubr.f32.mxu0 %v323
        %537 = vmatmul.mubr.f32.gmra.mxu0 %v322
        %v538 = vpop.f32.mrf.mxu0
        %v539 = vadd.f32 %v395, %v538
        %v540 = vpop.f32.mrf.mxu0
        %541 = vdwg.mxu0
        %542 = vmatprep.subr.mxu0 %v389
        %543 = vmatpush1.xpose.msra.mxu0 %v388
        %544 = vmatprep.subr.mxu0 %v385
        %545 = vmatpush1.xpose.msra.mxu0 %v384
        %546 = vmatprep.subr.mxu0 %v381
        %547 = vmatpush1.xpose.msra.mxu0 %v380
        %548 = vmatprep.subr.mxu0 %v377
        %549 = vmatpush1.xpose.msra.mxu0 %v376
        %550 = vmatprep.subr.mxu0 %v373
        %551 = vmatpush1.xpose.msra.mxu0 %v372
        %552 = vmatprep.subr.mxu0 %v369
        %553 = vmatpush1.xpose.msra.mxu0 %v368
        %554 = vmatprep.subr.mxu0 %v365
        %555 = vmatpush1.xpose.msra.mxu0 %v364
        %556 = vmatprep.subr.mxu0 %v361
        %557 = vmatpush1.xpose.msra.mxu0 %v360
        %558 = vmatprep.subr.mxu0 %v357
        %559 = vmatpush1.xpose.msra.mxu0 %v356
        %560 = vmatprep.subr.mxu0 %v353
        %561 = vmatpush1.xpose.msra.mxu0 %v352
        %562 = vmatprep.subr.mxu0 %v349
        %563 = vmatpush1.xpose.msra.mxu0 %v348
        %564 = vmatprep.subr.mxu0 %v345
        %565 = vmatpush1.xpose.msra.mxu0 %v344
        %566 = vmatprep.subr.mxu0 %v341
        %567 = vmatpush1.xpose.msra.mxu0 %v340
        %568 = vmatprep.subr.mxu0 %v337
        %569 = vmatpush1.xpose.msra.mxu0 %v336
        %570 = vmatprep.subr.mxu0 %v333
        %571 = vmatpush1.xpose.msra.mxu0 %v332
        %572 = vmatprep.subr.mxu0 %v329
        %573 = vmatpush1.xpose.msra.mxu0 %v328
        %574 = vmatprep.subr.mxu0 0.0
        %575 = vmatpush2.xpose.msra.mxu0 0.0
        %576 = vmatprep.subr.mxu0 0.0
        %577 = vmatpush2.xpose.msra.mxu0 0.0
        %578 = vmatprep.subr.mxu0 0.0
        %579 = vmatpush2.xpose.msra.mxu0 0.0
        %580 = vmatprep.subr.mxu0 0.0
        %581 = vmatpush2.xpose.msra.mxu0 0.0
        %582 = vmatprep.subr.mxu0 0.0
        %583 = vmatpush2.xpose.msra.mxu0 0.0
        %584 = vmatprep.subr.mxu0 0.0
        %585 = vmatpush2.xpose.msra.mxu0 0.0
        %586 = vmatprep.subr.mxu0 0.0
        %587 = vmatpush2.xpose.msra.mxu0 0.0
        %588 = vmatprep.subr.mxu0 0.0
        %589 = vmatpush2.xpose.msra.mxu0 0.0
        %590 = vmatprep.subr.mxu0 0.0
        %591 = vmatpush2.xpose.msra.mxu0 0.0
        %592 = vmatprep.subr.mxu0 0.0
        %593 = vmatpush2.xpose.msra.mxu0 0.0
        %594 = vmatprep.subr.mxu0 0.0
        %595 = vmatpush2.xpose.msra.mxu0 0.0
        %596 = vmatprep.subr.mxu0 0.0
        %597 = vmatpush2.xpose.msra.mxu0 0.0
        %598 = vmatprep.subr.mxu0 0.0
        %599 = vmatpush2.xpose.msra.mxu0 0.0
        %600 = vmatprep.subr.mxu0 0.0
        %601 = vmatpush2.xpose.msra.mxu0 0.0
        %602 = vmatprep.subr.mxu0 0.0
        %603 = vmatpush2.xpose.msra.mxu0 0.0
        %604 = vmatprep.subr.mxu0 0.0
        %605 = vmatpush2.xpose.msra.mxu0 0.0
        %606 = vmatprep.mubr.f32.mxu0 %v265
        %607 = vmatmul.mubr.f32.gmra.mxu0 %v264
        %v608 = vpop.f32.mrf.mxu0
        %v609 = vadd.f32 %v464, %v608
        %v610 = vpop.f32.mrf.mxu0
        %611 = vmatprep.mubr.f32.mxu0 %v269
        %612 = vmatmul.mubr.f32.gmra.mxu0 %v268
        %v613 = vpop.f32.mrf.mxu0
        %v614 = vadd.f32 %v469, %v613
        %v615 = vpop.f32.mrf.mxu0
        %616 = vmatprep.mubr.f32.mxu0 %v273
        %617 = vmatmul.mubr.f32.gmra.mxu0 %v272
        %v618 = vpop.f32.mrf.mxu0
        %v619 = vadd.f32 %v474, %v618
        %v620 = vpop.f32.mrf.mxu0
        %621 = vmatprep.mubr.f32.mxu0 %v277
        %622 = vmatmul.mubr.f32.gmra.mxu0 %v276
        %v623 = vpop.f32.mrf.mxu0
        %v624 = vadd.f32 %v479, %v623
        %v625 = vpop.f32.mrf.mxu0
        %626 = vmatprep.mubr.f32.mxu0 %v281
        %627 = vmatmul.mubr.f32.gmra.mxu0 %v280
        %v628 = vpop.f32.mrf.mxu0
        %v629 = vadd.f32 %v484, %v628
        %v630 = vpop.f32.mrf.mxu0
        %631 = vmatprep.mubr.f32.mxu0 %v285
        %632 = vmatmul.mubr.f32.gmra.mxu0 %v284
        %v633 = vpop.f32.mrf.mxu0
        %v634 = vadd.f32 %v489, %v633
        %v635 = vpop.f32.mrf.mxu0
        %636 = vmatprep.mubr.f32.mxu0 %v289
        %637 = vmatmul.mubr.f32.gmra.mxu0 %v288
        %v638 = vpop.f32.mrf.mxu0
        %v639 = vadd.f32 %v494, %v638
        %v640 = vpop.f32.mrf.mxu0
        %641 = vmatprep.mubr.f32.mxu0 %v293
        %642 = vmatmul.mubr.f32.gmra.mxu0 %v292
        %v643 = vpop.f32.mrf.mxu0
        %v644 = vadd.f32 %v499, %v643
        %v645 = vpop.f32.mrf.mxu0
        %646 = vmatprep.mubr.f32.mxu0 %v297
        %647 = vmatmul.mubr.f32.gmra.mxu0 %v296
        %v648 = vpop.f32.mrf.mxu0
        %v649 = vadd.f32 %v504, %v648
        %v650 = vpop.f32.mrf.mxu0
        %651 = vmatprep.mubr.f32.mxu0 %v301
        %652 = vmatmul.mubr.f32.gmra.mxu0 %v300
        %v653 = vpop.f32.mrf.mxu0
        %v654 = vadd.f32 %v509, %v653
        %v655 = vpop.f32.mrf.mxu0
        %656 = vmatprep.mubr.f32.mxu0 %v305
        %657 = vmatmul.mubr.f32.gmra.mxu0 %v304
        %v658 = vpop.f32.mrf.mxu0
        %v659 = vadd.f32 %v514, %v658
        %v660 = vpop.f32.mrf.mxu0
        %661 = vmatprep.mubr.f32.mxu0 %v309
        %662 = vmatmul.mubr.f32.gmra.mxu0 %v308
        %v663 = vpop.f32.mrf.mxu0
        %v664 = vadd.f32 %v519, %v663
        %v665 = vpop.f32.mrf.mxu0
        %666 = vmatprep.mubr.f32.mxu0 %v313
        %667 = vmatmul.mubr.f32.gmra.mxu0 %v312
        %v668 = vpop.f32.mrf.mxu0
        %v669 = vadd.f32 %v524, %v668
        %v670 = vpop.f32.mrf.mxu0
        %671 = vmatprep.mubr.f32.mxu0 %v317
        %672 = vmatmul.mubr.f32.gmra.mxu0 %v316
        %v673 = vpop.f32.mrf.mxu0
        %v674 = vadd.f32 %v529, %v673
        %v675 = vpop.f32.mrf.mxu0
        %676 = vmatprep.mubr.f32.mxu0 %v321
        %677 = vmatmul.mubr.f32.gmra.mxu0 %v320
        %v678 = vpop.f32.mrf.mxu0
        %v679 = vadd.f32 %v534, %v678
        %v680 = vpop.f32.mrf.mxu0
        %681 = vmatprep.mubr.f32.mxu0 %v325
        %682 = vmatmul.mubr.f32.gmra.mxu0 %v324
        %v683 = vpop.f32.mrf.mxu0
        %v684 = vadd.f32 %v539, %v683
        %v685 = vpop.f32.mrf.mxu0
        %686 = vdwg.mxu0
        %687 = vst [vmem:[%s253] sm:$0xff] %v609
        %688 = vst [vmem:[%s253 + $0x8] sm:$0xff] %v614
        %689 = vst [vmem:[%s253 + $0x10] sm:$0xff] %v619
        %690 = vst [vmem:[%s253 + $0x18] sm:$0xff] %v624
        %691 = vst [vmem:[%s253 + $0x20] sm:$0xff] %v629
        %692 = vst [vmem:[%s253 + $0x28] sm:$0xff] %v634
        %693 = vst [vmem:[%s253 + $0x30] sm:$0xff] %v639
        %694 = vst [vmem:[%s253 + $0x38] sm:$0xff] %v644
        %695 = vst [vmem:[%s253 + $0x40] sm:$0xff] %v649
        %696 = vst [vmem:[%s253 + $0x48] sm:$0xff] %v654
        %697 = vst [vmem:[%s253 + $0x50] sm:$0xff] %v659
        %698 = vst [vmem:[%s253 + $0x58] sm:$0xff] %v664
        %699 = vst [vmem:[%s253 + $0x60] sm:$0xff] %v669
        %700 = vst [vmem:[%s253 + $0x68] sm:$0xff] %v674
        %701 = vst [vmem:[%s253 + $0x70] sm:$0xff] %v679
        %702 = vst [vmem:[%s253 + $0x78] sm:$0xff] %v684
        %s703 = sand.u32 %s132, 1
        %s704 = scalar_lea.sflag [#allocation4], %s703
        %s705 = sand.u32 %s132, 1
        %s706 = smul.addr %s705, 128
        %s707 = scalar_lea.vmem [#allocation7], %s706
        // Predicated region
        $region41: #{tpu_custom_call.1} parent=31 // pred_check
          %p708 = pneg %p142
        $region42: #{tpu_custom_call.1} parent=31 // pred_check_branch
          %710 = sbr.rel (%p708) target = $region44
        $region43: #{tpu_custom_call.1} parent=31 // pred_region
          %s711 = smul.u32 16, %s26
          %s713 = ssub.s32 2048, 2048
          %714 = vsyncadd %s704, %s713
          %s715 = smul.addr %s711, 2
          %s716 = sadd.s32 %s27, %s715
          %s717 = smul.addr %s716, 128
          %s718 = scalar_lea.hbm %s3, %s717
          %s719 = sshll.u32 %s707, 4
          %s720 = int_to_ptr.vmem [resolvable:$true] %s719
          %725 = dma.vmem_to_hbm [thread:$0]  %s720, 2048, %s718, %s704, 128, 256, 8
        $region44: #{tpu_custom_call.1} parent=31 // pred_fallthru
          _
      $region32: #{tpu_custom_call.1} parent=5 // pred_fallthru
        _
      %p726 = scmp.le.s32.totalorder 2, %s16
      // Predicated region
      $region45: #{tpu_custom_call.1} parent=5 // pred_check
        %p727 = pneg %p726
      $region46: #{tpu_custom_call.1} parent=5 // pred_check_branch
        %729 = sbr.rel (%p727) target = $region48
      $region47: #{tpu_custom_call.1} parent=5 // pred_region
        %s730 = ssub.s32 %s16, 2
        // Predicated region
        $region49: #{tpu_custom_call.1} parent=47 // pred_check
          %p731 = pneg %p148
        $region50: #{tpu_custom_call.1} parent=47 // pred_check_branch
          %733 = sbr.rel (%p731) target = $region52
        $region51: #{tpu_custom_call.1} parent=47 // pred_region
          %s734 = sand.u32 %s133, 1
          %s735 = scalar_lea.sflag [#allocation4], %s734
          %s736 = sand.u32 %s133, 1
          %s737 = smul.addr %s736, 128
          %s738 = scalar_lea.vmem [#allocation7], %s737
          %739 = dma.done %s735, 2048
        $region52: #{tpu_custom_call.1} parent=47 // pred_fallthru
          _
      $region48: #{tpu_custom_call.1} parent=5 // pred_fallthru
        _
    $region6: #{tpu_custom_call.1} parent=1 // loop_footer
      %s20 = sadd.s32 1, %s16
    $region7: #{tpu_custom_call.1} parent=1 // loop_footer_branch
      %15 = sbr.rel target = $region3
    $region8: #{tpu_custom_call.1} parent=1 // loop_exit
      _
    %740 = vsyncpa [#allocation3], 1
    %s741 = scalar_lea.sflag [#allocation3], 1
    %742 = vsyncpa %s741, 1
    %743 = vsyncpa [#allocation6], 1
    %s744 = scalar_lea.sflag [#allocation6], 1
    %745 = vsyncpa %s744, 1
    %746 = vsyncpa [#allocation4], 1
    %s747 = scalar_lea.sflag [#allocation4], 1
    %748 = vsyncpa %s747, 1

</llo_original>
